<compile_context>
chip_gen: v7x
topology: tpu7x:2x2x1
jax: 0.10.0
libtpu: 0.0.40
codegen_flags: <defaults>
</compile_context>

<pallas_src>
import functools

import jax
import jax.numpy as jnp
from jax.experimental import pallas as pl
from jax.experimental.pallas import tpu as pltpu


_MAX_COL_TILE = 2048     # HBM roofline saturates around 512-2048 lane tiles
_MIN_GRID_STEPS = 4      # >= 4 steps => each v7x TC gets >= 2 pipelined steps


# ---------------------------------------------------------------------------
# Kernels
# ---------------------------------------------------------------------------

def _softmax_one_pass_kernel(x_ref, o_ref):
    """All rows of the column tile are resident: max -> exp -> sum -> exact divide."""
    x = x_ref[...].astype(jnp.float32)
    c = jnp.max(x, axis=0, keepdims=True)
    if jnp.dtype(o_ref.dtype) == jnp.dtype(jnp.float32):
        # Reuse the output block as the exp() temp: saves one full-block VMEM buffer
        # and a store+reload (notably relieves v5e's single vector-store slot).
        o_ref[...] = jnp.exp(x - c)
        total = jnp.sum(o_ref[...], axis=0, keepdims=True)
        o_ref[...] = o_ref[...] / total          # exact divide: only (1, tile) elements
    else:
        e = jnp.exp(x - c)
        total = jnp.sum(e, axis=0, keepdims=True)
        o_ref[...] = (e / total).astype(o_ref.dtype)


def _softmax_stats_kernel(x_ref, m_ref, l_ref, *, n_rows, row_tile):
    """Tall-N pass 1: running column max + rescaled running sum (online softmax stats)."""
    i = pl.program_id(1)

    @pl.when(i == 0)
    def _():
        m_ref[...] = jnp.full_like(m_ref, -jnp.inf)
        l_ref[...] = jnp.zeros_like(l_ref)

    x = x_ref[...].astype(jnp.float32)
    # Mask out-of-bounds rows of the (padded) last row block so they do not
    # contribute to the column reduction.
    row = i * row_tile + jax.lax.broadcasted_iota(jnp.int32, x.shape, 0)
    x = jnp.where(row < n_rows, x, -jnp.inf)

    m_prev = m_ref[...]
    m_new = jnp.maximum(m_prev, jnp.max(x, axis=0, keepdims=True))
    l_ref[...] = (l_ref[...] * jnp.exp(m_prev - m_new)
                  + jnp.sum(jnp.exp(x - m_new), axis=0, keepdims=True))
    m_ref[...] = m_new


def _softmax_normalize_kernel(x_ref, m_ref, l_ref, o_ref):
    """Tall-N pass 2: out = exp(x - m) / l."""
    x = x_ref[...].astype(jnp.float32)
    o_ref[...] = (jnp.exp(x - m_ref[...]) / l_ref[...]).astype(o_ref.dtype)


# ---------------------------------------------------------------------------
# Tiling / VMEM heuristics
# ---------------------------------------------------------------------------

def _vmem_budget_and_limit():
    """Generation-aware (budget, scoped-limit) in bytes."""
    try:
        cap = pltpu.get_tpu_info().vmem_capacity_bytes
    except Exception:
        cap = None
    if cap is not None and cap >= 100 * 1024 * 1024:       # v5e / v6e: 128 MiB VMEM
        return 64 * 1024 * 1024, 96 * 1024 * 1024
    return 26 * 1024 * 1024, 48 * 1024 * 1024               # v7x (64 MiB/TC) or unknown


def _choose_col_tile(n_rows, d, bytes_per_elem, budget):
    """Largest 128-multiple lane tile (<= d rounded down) within the VMEM budget,
    capped at _MAX_COL_TILE and sized to leave >= _MIN_GRID_STEPS grid steps."""
    if d <= 128:
        return d                                     # one full-width block
    per_chunk = n_rows * 128 * bytes_per_elem        # cost of one 128-lane slab
    k = max(1, budget // max(per_chunk, 1))
    k = min(k, _MAX_COL_TILE // 128, d // 128)       # never exceed the array width
    total_chunks = pl.cdiv(d, 128)
    if total_chunks >= _MIN_GRID_STEPS:
        k = min(k, max(1, total_chunks // _MIN_GRID_STEPS))
    return 128 * k


# ---------------------------------------------------------------------------
# Wrappers
# ---------------------------------------------------------------------------

def _two_pass(x, budget, vmem_limit):
    """Tall-N path: pass 1 computes per-column (max, sum), pass 2 normalizes."""
    n, d = x.shape
    in_item = jnp.dtype(x.dtype).itemsize
    out_item = in_item

    col_tile = d if d <= 128 else min(512, 128 * (d // 128))
    bpe = 2 * in_item + 2 * out_item + 8             # conservative: covers both passes
    row_tile = max(8, (budget // (col_tile * bpe)) // 8 * 8)
    row_tile = min(row_tile, 4096)
    if n >= 4 * 8:
        row_tile = min(row_tile, max(8, (n // 4) // 8 * 8))   # keep >= ~4 row steps

    n_col = pl.cdiv(d, col_tile)
    n_row = pl.cdiv(n, row_tile)

    m, l = pl.pallas_call(
        functools.partial(_softmax_stats_kernel, n_rows=n, row_tile=row_tile),
        out_shape=(jax.ShapeDtypeStruct((1, d), jnp.float32),
                   jax.ShapeDtypeStruct((1, d), jnp.float32)),
        grid=(n_col, n_row),
        in_specs=[pl.BlockSpec((row_tile, col_tile), lambda j, i: (i, j))],
        out_specs=(pl.BlockSpec((1, col_tile), lambda j, i: (0, j)),
                   pl.BlockSpec((1, col_tile), lambda j, i: (0, j))),
        compiler_params=pltpu.CompilerParams(
            dimension_semantics=("parallel", "arbitrary"),
            vmem_limit_bytes=vmem_limit,
        ),
    )(x)

    out = pl.pallas_call(
        _softmax_normalize_kernel,
        out_shape=jax.ShapeDtypeStruct((n, d), x.dtype),
        grid=(n_col, n_row),
        in_specs=[pl.BlockSpec((row_tile, col_tile), lambda j, i: (i, j)),
                  pl.BlockSpec((1, col_tile), lambda j, i: (0, j)),
                  pl.BlockSpec((1, col_tile), lambda j, i: (0, j))],
        out_specs=pl.BlockSpec((row_tile, col_tile), lambda j, i: (i, j)),
        compiler_params=pltpu.CompilerParams(
            dimension_semantics=("parallel", "parallel"),
            vmem_limit_bytes=vmem_limit,
        ),
    )(x, m, l)
    return out


def stable_softmax(x, *, force_two_pass=False):
    """Softmax over axis 0 of a 2-D array (matches the PyTorch StableSoftmax.forward)."""
    if x.ndim != 2:
        raise ValueError("stable_softmax expects a 2-D array (softmax over axis 0)")
    n, d = x.shape
    in_item = jnp.dtype(x.dtype).itemsize
    out_item = in_item
    budget, vmem_limit = _vmem_budget_and_limit()

    # Per-element VMEM cost of the one-pass kernel:
    #   input (double-buffered) + output (double-buffered) + one f32 temp.
    bpe_one_pass = 2 * in_item + 2 * out_item + 4
    min_block_bytes = n * min(d, 128) * bpe_one_pass
    if force_two_pass or min_block_bytes > budget:
        return _two_pass(x, budget, vmem_limit)

    col_tile = _choose_col_tile(n, d, bpe_one_pass, budget)
    grid = (pl.cdiv(d, col_tile),)    # partial last block handled by Pallas (masked vst)

    return pl.pallas_call(
        _softmax_one_pass_kernel,
        out_shape=jax.ShapeDtypeStruct((n, d), x.dtype),
        grid=grid,
        in_specs=[pl.BlockSpec((n, col_tile), lambda j: (0, j))],
        out_specs=pl.BlockSpec((n, col_tile), lambda j: (0, j)),
        compiler_params=pltpu.CompilerParams(
            dimension_semantics=("parallel",),
            vmem_limit_bytes=vmem_limit,
        ),
    )(x)


def _reference(x):
    c = jnp.max(x, axis=0, keepdims=True)
    e = jnp.exp(x - c)
    return e / jnp.sum(e, axis=0, keepdims=True)


if __name__ == "__main__":
    key = jax.random.PRNGKey(0)
    k1, k2, k3 = jax.random.split(key, 3)

    # Main case mirroring the module's forward: (seq=8, hidden=32), softmax over dim 0.
    x = jax.random.normal(k1, (8, 32), dtype=jnp.float32)
    out = jax.block_until_ready(stable_softmax(x))
    ref = _reference(x)
    assert out.shape == x.shape and out.dtype == x.dtype
    assert jnp.allclose(out, ref, atol=1e-5, rtol=1e-5)
    # Softmax over dim 0 => every column sums to 1 (exact divide now).
    assert jnp.allclose(jnp.sum(out, axis=0), jnp.ones((32,), jnp.float32), atol=1e-5)

    # Unaligned D exercises the cdiv grid / masked partial last lane block (no pad/slice).
    x2 = jax.random.normal(k2, (8, 200), dtype=jnp.float32)
    out2 = jax.block_until_ready(stable_softmax(x2))
    assert jnp.allclose(out2, _reference(x2), atol=1e-5, rtol=1e-5)

    # Tall-N two-pass path (forced so it is exercised at small test shapes),
    # with N not a multiple of the row tile to exercise the row mask.
    x3 = jax.random.normal(k3, (37, 160), dtype=jnp.float32)
    out3 = jax.block_until_ready(stable_softmax(x3, force_two_pass=True))
    assert jnp.allclose(out3, _reference(x3), atol=1e-5, rtol=1e-5)

    print("KERNEL_OK")
</pallas_src>

<mosaic_0001>
module attributes {stable_mosaic.version = 11 : i64} {
  func.func @_softmax_one_pass_kernel(%arg0: i32, %arg1: memref<8x32xf32, #tpu.memory_space<vmem>>, %arg2: memref<8x32xf32, #tpu.memory_space<vmem>>) attributes {dimension_semantics = [#tpu.dimension_semantics<parallel>], iteration_bounds = array<i64: 1>, scalar_prefetch = 0 : i64, scratch_operands = 0 : i64, tpu.core_type = #tpu.core_type<tc>, window_params = [{transform_indices = @transform_0, window_bounds = array<i64: 8, 32>}, {transform_indices = @transform_1, window_bounds = array<i64: 8, 32>}]} {
    %c0 = arith.constant 0 : index
    %c0_0 = arith.constant 0 : index
    %0 = vector.load %arg1[%c0, %c0_0] : memref<8x32xf32, #tpu.memory_space<vmem>>, vector<8x32xf32>
    %cst = arith.constant dense<0xFF800000> : vector<32xf32>
    %1 = vector.multi_reduction <maximumf>, %0, %cst [0] : vector<8x32xf32> to vector<32xf32>
    %2 = vector.shape_cast %1 : vector<32xf32> to vector<1x32xf32>
    %3 = vector.broadcast %2 : vector<1x32xf32> to vector<8x32xf32>
    %4 = arith.subf %0, %3 : vector<8x32xf32>
    %5 = math.exp %4 : vector<8x32xf32>
    %c0_1 = arith.constant 0 : index
    %c0_2 = arith.constant 0 : index
    %6 = vector.load %arg2[%c0_1, %c0_2] : memref<8x32xf32, #tpu.memory_space<vmem>>, vector<8x32xf32>
    tpu.vector_store %arg2[%c0_1, %c0_2], %5 {strides = array<i32>} : memref<8x32xf32, #tpu.memory_space<vmem>>, vector<8x32xf32>,
    %c0_3 = arith.constant 0 : index
    %c0_4 = arith.constant 0 : index
    %7 = vector.load %arg2[%c0_3, %c0_4] : memref<8x32xf32, #tpu.memory_space<vmem>>, vector<8x32xf32>
    %cst_5 = arith.constant dense<0.000000e+00> : vector<32xf32>
    %8 = vector.multi_reduction <add>, %7, %cst_5 [0] : vector<8x32xf32> to vector<32xf32>
    %9 = vector.shape_cast %8 : vector<32xf32> to vector<1x32xf32>
    %c0_6 = arith.constant 0 : index
    %c0_7 = arith.constant 0 : index
    %10 = vector.load %arg2[%c0_6, %c0_7] : memref<8x32xf32, #tpu.memory_space<vmem>>, vector<8x32xf32>
    %11 = vector.broadcast %9 : vector<1x32xf32> to vector<8x32xf32>
    %12 = arith.divf %10, %11 : vector<8x32xf32>
    %c0_8 = arith.constant 0 : index
    %c0_9 = arith.constant 0 : index
    %13 = vector.load %arg2[%c0_8, %c0_9] : memref<8x32xf32, #tpu.memory_space<vmem>>, vector<8x32xf32>
    tpu.vector_store %arg2[%c0_8, %c0_9], %12 {strides = array<i32>} : memref<8x32xf32, #tpu.memory_space<vmem>>, vector<8x32xf32>,
    return
  }
  func.func @transform_0(%arg0: i32) -> (i32, i32) {
    %c0_i32 = arith.constant 0 : i32
    %c0_i32_0 = arith.constant 0 : i32
    return %c0_i32, %arg0 : i32, i32
  }
  func.func @transform_1(%arg0: i32) -> (i32, i32) {
    %c0_i32 = arith.constant 0 : i32
    %c0_i32_0 = arith.constant 0 : i32
    return %c0_i32, %arg0 : i32, i32
  }
}

</mosaic_0001>

<llo_original>
// kernel: tpu_custom_call.1
$region0: #{tpu_custom_call.1}
  #allocation0 [shape = 'u32[]', space=smem, size = 0x4, offset = 0x4, fixed_abs, tag = 'smem constant byte address 0x4 - core index']
  #allocation1 [shape = 'u32[144,128]{1,0:T(1,128)}', space=vmem, size = 0x12000, scoped, tag = 'internal scratch']
  %s0 = inlined_call_operand.hbm [shape: f32[8,32], index: 0, kind: input, shape index: {}]
  %s1 = inlined_call_operand.hbm [shape: f32[8,32], index: 1, kind: output, shape index: {}]
  %s2 = sld [smem:[#allocation0]]
  $region18: #{tpu_custom_call.1} parent=0
    _
  %s4 = ssub.s32 1, %s2
  %s5 = scalar_select 0, %s4, %s2
  $region1: #{tpu_custom_call.1} parent=0
    #allocation2 [shape = 'u8[4096]{0}', space=vmem, size = 0x1000, scoped, tag = 'input window, operand 0, single buffered']
    #allocation3 [shape = 's32[1]{0}', space=sflag, size = 0x4, scoped, tag = 'scoped memory for tpu_custom_call.1']
    #allocation4 [shape = 's32[1]{0}', space=sflag, size = 0x4, scoped, tag = 'scoped memory for tpu_custom_call.1']
    #allocation5 [shape = 'u8[4096]{0}', space=vmem, size = 0x1000, scoped, tag = 'output window, operand 0, single buffered']
    %6 = vsyncpa [#allocation3], 0
    %7 = vsyncpa [#allocation4], 0
    // Predicated region
    $region2: #{tpu_custom_call.1} parent=1 // pred_check
      _
    $region3: #{tpu_custom_call.1} parent=1 // pred_check_branch
      %9 = sbr.rel (0) target = $region5
    $region4: #{tpu_custom_call.1} parent=1 // pred_region
      %s11 = ssub.s32 128, 128
      %12 = vsyncadd [#allocation3], %s11
      %s14 = sshll.u32 [#allocation2], 4
      %s15 = int_to_ptr.vmem [resolvable:$true] %s14
      %17 = dma.hbm_to_vmem [thread:$0]  %s0, 128, %s15, [#allocation3]
    $region5: #{tpu_custom_call.1} parent=1 // pred_fallthru
      _
    // Predicated region
    $region6: #{tpu_custom_call.1} parent=1 // pred_check
      _
    $region7: #{tpu_custom_call.1} parent=1 // pred_check_branch
      %19 = sbr.rel (0) target = $region9
    $region8: #{tpu_custom_call.1} parent=1 // pred_region
      %20 = dma.done [#allocation3], 128
    $region9: #{tpu_custom_call.1} parent=1 // pred_fallthru
      _
    %v21 = vld [vmem:[#allocation2] sm:$0xff]
    %vm22 = vcmask 261120
    %v23 = vsel %vm22, %v21, -inf
    %v24 = vrot.slane %v23, 4
    %v25 = vmax.f32 %v23, %v24
    %v26 = vrot.slane %v25, 2
    %v27 = vmax.f32 %v25, %v26
    %v28 = vrot.slane %v27, 1
    %v29 = vmax.f32 %v27, %v28
    %v30 = vsub.f32 %v21, %v29
    %v31 = vmul.f32 %v30, 1.442695
    %v32 = vpow.pop %v31
    %33 = vst.msk [vmem:[#allocation5] sm:$0xff] %vm22, %v32
    %v34 = vld [vmem:[#allocation5] sm:$0xff]
    %v35 = vsel %vm22, %v34, 0.0
    %v36 = vrot.slane %v35, 4
    %v37 = vadd.f32 %v35, %v36
    %v38 = vrot.slane %v37, 2
    %v39 = vadd.f32 %v37, %v38
    %v40 = vrot.slane %v39, 1
    %v41 = vadd.f32 %v39, %v40
    %v42 = vrcp.pop %v41
    %v43 = vmul.f32 %v34, %v42
    %44 = vst.msk [vmem:[#allocation5] sm:$0xff] %vm22, %v43
    // Predicated region
    $region10: #{tpu_custom_call.1} parent=1 // pred_check
      _
    $region11: #{tpu_custom_call.1} parent=1 // pred_check_branch
      %46 = sbr.rel (0) target = $region13
    $region12: #{tpu_custom_call.1} parent=1 // pred_region
      %s48 = ssub.s32 128, 128
      %49 = vsyncadd [#allocation4], %s48
      %s51 = sshll.u32 [#allocation5], 4
      %s52 = int_to_ptr.vmem [resolvable:$true] %s51
      %54 = dma.vmem_to_hbm [thread:$0]  %s52, 128, %s1, [#allocation4]
    $region13: #{tpu_custom_call.1} parent=1 // pred_fallthru
      _
    // Predicated region
    $region14: #{tpu_custom_call.1} parent=1 // pred_check
      _
    $region15: #{tpu_custom_call.1} parent=1 // pred_check_branch
      %56 = sbr.rel (0) target = $region17
    $region16: #{tpu_custom_call.1} parent=1 // pred_region
      %57 = dma.done [#allocation4], 128
    $region17: #{tpu_custom_call.1} parent=1 // pred_fallthru
      _
    %58 = vsyncpa [#allocation3], 1
    %59 = vsyncpa [#allocation4], 1

</llo_original>
